<compile_context>
chip_gen: v5e
topology: v5e:2x2
jax: 0.10.0
libtpu: 0.0.40
codegen_flags: <defaults>
</compile_context>

<pallas_src>
import functools

import jax
import jax.numpy as jnp
from jax.experimental import pallas as pl
from jax.experimental.pallas import tpu as pltpu


def _round_up(x, m):
    return (x + m - 1) // m * m


def _physical_vmem_bytes():
    """Best-effort physical VMEM query; conservative (v7x) fallback."""
    try:
        info = pltpu.get_tpu_info()
        for attr in ("vmem_capacity_bytes", "vmem_size_bytes", "vmem_bytes"):
            v = getattr(info, attr, None)
            if v:
                return int(v)
    except Exception:
        pass
    return 64 << 20


def prepare_weight(w, d_pad):
    """Pad to (d_pad, d_pad) and cast to bf16.  Hoist/cache this across calls
    when the same weights are reused — it is a full HBM pass over D^2."""
    if w.shape == (d_pad, d_pad) and w.dtype == jnp.bfloat16:
        return w
    r, c = w.shape
    if (r, c) != (d_pad, d_pad):
        w = jnp.pad(w, ((0, d_pad - r), (0, d_pad - c)))
    return w.astype(jnp.bfloat16)


def _pad_row(v, d_pad):
    v = v.astype(jnp.float32)
    d = v.shape[0]
    if d != d_pad:
        v = jnp.pad(v, (0, d_pad - d))
    return v.reshape(1, d_pad)


def _sublayer_connection_kernel(x_ref, a2_ref, b2_ref, w_ref, bias_ref,
                                o_ref, normed_ref, *, eps, d_true, tn):
    """Grid = (row_tiles, col_tiles).  LayerNorm is computed once per row tile
    (j == 0) into a bf16 scratch and reused for every output-column step."""
    j = pl.program_id(1)

    @pl.when(j == 0)
    def _():
        xf = x_ref[...].astype(jnp.float32)             # (tm, Dp), f32 stats
        # One-pass stats; padded lanes are zero so they add nothing to sum/sumsq.
        s = jnp.sum(xf, axis=-1, keepdims=True)
        ss = jnp.sum(xf * xf, axis=-1, keepdims=True)
        mean = s * (1.0 / d_true)
        # Unbiased variance (ddof=1), matching torch.std; NaN for d_true==1, as torch.
        inv_dm1 = (1.0 / (d_true - 1)) if d_true > 1 else float("nan")
        var = (ss - d_true * (mean * mean)) * inv_dm1
        var = jnp.maximum(var, 0.0)                     # guard cancellation negatives
        std = jnp.sqrt(var)
        inv = pl.reciprocal(std + eps, approx=True)     # EUP path, off VPU chain
        # a_2 / b_2 are zero-padded, so padded lanes of `normed` are exactly 0
        # and contribute nothing to the matmul below.
        normed = a2_ref[...] * ((xf - mean) * inv) + b2_ref[...]
        normed_ref[...] = normed.astype(normed_ref.dtype)   # bf16, MXU operand

    # --- sublayer: Linear(D -> tn slice) on the MXU, bf16 in / f32 accumulate ---
    sub = jnp.dot(normed_ref[...], w_ref[...], preferred_element_type=jnp.float32)
    sub = sub + bias_ref[...]

    # --- dropout (eval mode = identity) + residual add; residual read from the
    #     already-resident full-row block (x streamed from HBM only once). ---
    col = pl.multiple_of(j * tn, 128)
    res = x_ref[:, pl.ds(col, tn)].astype(jnp.float32)
    o_ref[...] = (res + sub).astype(o_ref.dtype)


def sublayer_connection(x, a2, b2, w, bias, *, eps=1e-6, tm=256, tn=512):
    """x: [B, S, D]; a2, b2, bias: [D]; w: [D, D] (or pre-padded bf16 [Dp, Dp])."""
    B, S, D = x.shape
    rows = B * S
    dtype = x.dtype
    itemsize = jnp.dtype(dtype).itemsize

    Dp = _round_up(D, 128)                              # lane-dense feature dim
    tm = _round_up(min(tm, _round_up(rows, 16)), 16)    # 16-aligned row tile

    # ---- VMEM budget: ~75% of physical (≈48 MiB on v7x, ≈96 MiB on v5e/v6e) ---
    phys = _physical_vmem_bytes()
    budget = int(phys * 0.75)

    def vmem_need(tm_, tn_, wbufs=2):
        return (2 * tm_ * Dp * itemsize        # x row block (double-buffered)
                + 2 * tm_ * tn_ * itemsize     # output block
                + wbufs * Dp * tn_ * 2         # bf16 weight block(s)
                + tm_ * Dp * 2                 # normed scratch (bf16)
                + 2 * tm_ * Dp * 4             # f32 LayerNorm temporaries (j==0)
                + 2 * tn_ * 4 + 4 * Dp * 4)    # bias / gamma / beta

    # Prefer keeping the whole bf16 weight VMEM-resident (fetched once per
    # kernel, never re-streamed per row tile); else column-stream it.
    candidates = [c for c in range(128, Dp + 1, 128) if Dp % c == 0]
    if vmem_need(tm, Dp, wbufs=2) <= budget:
        tn = Dp
    else:
        fits = [c for c in candidates if c <= tn and vmem_need(tm, c) <= budget]
        tn = max(fits) if fits else candidates[0]
        while vmem_need(tm, tn) > budget and tm > 16:
            tm = max(16, _round_up(tm // 2, 16))

    weight_resident = (tn == Dp)
    # Deeper weight buffering only helps on 128-MiB parts when still streaming.
    use_deep_buffer = ((not weight_resident)
                       and phys >= (100 << 20)
                       and vmem_need(tm, tn, wbufs=3) <= budget)

    rows_p = _round_up(rows, tm)
    grid = (rows_p // tm, Dp // tn)

    # ---- padding (skipped when already aligned) + hoistable weight prep -------
    x2d = x.reshape(rows, D)
    if rows_p != rows or Dp != D:
        x2d = jnp.pad(x2d, ((0, rows_p - rows), (0, Dp - D)))
    a2p = _pad_row(a2, Dp)
    b2p = _pad_row(b2, Dp)
    biasp = _pad_row(bias, Dp)
    wp = prepare_weight(w, Dp)                         # no-op if pre-padded bf16

    # ---- scheduler hint (reflects actual streaming policy) --------------------
    weight_passes = 1 if weight_resident else (rows_p // tm)
    cost = pl.CostEstimate(
        flops=2 * rows_p * Dp * Dp + 10 * rows_p * Dp,
        transcendentals=2 * rows_p,
        bytes_accessed=(rows_p * Dp * itemsize         # x (read once)
                        + rows_p * Dp * itemsize       # out
                        + weight_passes * Dp * Dp * 2  # bf16 weight
                        + 4 * Dp * 4))                 # gamma/beta/bias

    need = vmem_need(tm, tn, wbufs=(1 if weight_resident else (3 if use_deep_buffer else 2)))
    vmem_limit = min(max(int(need * 1.3) + (2 << 20), 32 << 20), int(phys * 0.85))

    if weight_resident:
        w_spec = pl.BlockSpec((Dp, Dp), lambda i, j: (0, 0))       # fetched once
    elif use_deep_buffer:
        w_spec = pl.BlockSpec((Dp, tn), lambda i, j: (0, j),
                              pipeline_mode=pl.Buffered(3))        # v5e/v6e only
    else:
        w_spec = pl.BlockSpec((Dp, tn), lambda i, j: (0, j))

    kernel = functools.partial(_sublayer_connection_kernel,
                               eps=eps, d_true=D, tn=tn)

    out = pl.pallas_call(
        kernel,
        out_shape=jax.ShapeDtypeStruct((rows_p, Dp), dtype),
        grid_spec=pltpu.PrefetchScalarGridSpec(
            num_scalar_prefetch=0,
            grid=grid,
            in_specs=[
                pl.BlockSpec((tm, Dp), lambda i, j: (i, 0)),   # x (LayerNorm + residual)
                pl.BlockSpec((1, Dp), lambda i, j: (0, 0)),    # a_2 (gamma)
                pl.BlockSpec((1, Dp), lambda i, j: (0, 0)),    # b_2 (beta)
                w_spec,                                        # sublayer weight (bf16)
                pl.BlockSpec((1, tn), lambda i, j: (0, j)),    # sublayer bias
            ],
            out_specs=pl.BlockSpec((tm, tn), lambda i, j: (i, j)),
            scratch_shapes=[pltpu.VMEM((tm, Dp), jnp.bfloat16)],   # cached LayerNorm(x)
        ),
        compiler_params=pltpu.CompilerParams(
            dimension_semantics=("parallel", "arbitrary"),
            vmem_limit_bytes=vmem_limit),
        cost_estimate=cost,
    )(x2d, a2p, b2p, wp, biasp)

    return out[:rows, :D].reshape(B, S, D)


def _reference(x, a2, b2, w, bias, eps=1e-6):
    """Pure-f32 reference matching the PyTorch module semantics."""
    xf = x.astype(jnp.float32)
    D = xf.shape[-1]
    mean = jnp.mean(xf, axis=-1, keepdims=True)
    c = xf - mean
    std = jnp.sqrt(jnp.sum(c * c, axis=-1, keepdims=True) / (D - 1))
    normed = a2 * c / (std + eps) + b2
    sub = normed @ w + bias
    return (xf + sub).astype(x.dtype)


if __name__ == "__main__":
    B, S, D = 2, 8, 32
    key = jax.random.PRNGKey(0)
    kx, kw = jax.random.split(key)

    x = jax.random.normal(kx, (B, S, D), dtype=jnp.float32)

    # LayerNorm params as in __init__: ones / zeros.
    a2 = jnp.ones((D,), jnp.float32)
    b2 = jnp.zeros((D,), jnp.float32)
    # Deterministic sublayer Linear(D, D) params.
    w = jax.random.normal(kw, (D, D), dtype=jnp.float32) / jnp.sqrt(D)
    bias = jnp.zeros((D,), jnp.float32)

    out = sublayer_connection(x, a2, b2, w, bias)
    out = jax.block_until_ready(out)

    ref = _reference(x, a2, b2, w, bias)
    assert out.shape == (B, S, D)
    # Tolerance accounts for bf16 MXU operands + approx reciprocal in the kernel.
    assert jnp.allclose(out, ref, atol=3e-2, rtol=3e-2), "mismatch vs reference"
    print("KERNEL_OK")
</pallas_src>

<mosaic_0001>
module attributes {stable_mosaic.version = 11 : i64} {
  func.func @_sublayer_connection_kernel(%arg0: i32, %arg1: i32, %arg2: memref<16x128xf32, #tpu.memory_space<vmem>>, %arg3: memref<1x128xf32, #tpu.memory_space<vmem>>, %arg4: memref<1x128xf32, #tpu.memory_space<vmem>>, %arg5: memref<128x128xbf16, #tpu.memory_space<vmem>>, %arg6: memref<1x128xf32, #tpu.memory_space<vmem>>, %arg7: memref<16x128xf32, #tpu.memory_space<vmem>>, %arg8: memref<16x128xbf16, #tpu.memory_space<vmem>>) attributes {dimension_semantics = [#tpu.dimension_semantics<parallel>, #tpu.dimension_semantics<arbitrary>], iteration_bounds = array<i64: 1, 1>, scalar_prefetch = 0 : i64, scratch_operands = 1 : i64, tpu.core_type = #tpu.core_type<tc>, window_params = [{transform_indices = @transform_0, window_bounds = array<i64: 16, 128>}, {pipeline_mode = #tpu.pipeline_mode<synchronous>, transform_indices = @transform_1, window_bounds = array<i64: 1, 128>}, {pipeline_mode = #tpu.pipeline_mode<synchronous>, transform_indices = @transform_2, window_bounds = array<i64: 1, 128>}, {pipeline_mode = #tpu.pipeline_mode<synchronous>, transform_indices = @transform_3, window_bounds = array<i64: 128, 128>}, {transform_indices = @transform_4, window_bounds = array<i64: 1, 128>}, {transform_indices = @transform_5, window_bounds = array<i64: 16, 128>}]} {
    %c0_i32 = arith.constant 0 : i32
    %0 = arith.cmpi eq, %arg1, %c0_i32 : i32
    %1 = arith.extui %0 : i1 to i32
    %c0_i32_0 = arith.constant 0 : i32
    %2 = arith.cmpi ne, %1, %c0_i32_0 : i32
    scf.if %2 {
      %c0_9 = arith.constant 0 : index
      %c0_10 = arith.constant 0 : index
      %15 = vector.load %arg2[%c0_9, %c0_10] : memref<16x128xf32, #tpu.memory_space<vmem>>, vector<16x128xf32>
      %cst_11 = arith.constant dense<0.000000e+00> : vector<16xf32>
      %16 = vector.multi_reduction <add>, %15, %cst_11 [1] : vector<16x128xf32> to vector<16xf32>
      %17 = vector.shape_cast %16 : vector<16xf32> to vector<16x1xf32>
      %18 = arith.mulf %15, %15 : vector<16x128xf32>
      %cst_12 = arith.constant dense<0.000000e+00> : vector<16xf32>
      %19 = vector.multi_reduction <add>, %18, %cst_12 [1] : vector<16x128xf32> to vector<16xf32>
      %20 = vector.shape_cast %19 : vector<16xf32> to vector<16x1xf32>
      %cst_13 = arith.constant 3.125000e-02 : f32
      %21 = vector.broadcast %cst_13 : f32 to vector<16x1xf32>
      %22 = arith.mulf %17, %21 : vector<16x1xf32>
      %23 = arith.mulf %22, %22 : vector<16x1xf32>
      %cst_14 = arith.constant 3.200000e+01 : f32
      %24 = vector.broadcast %cst_14 : f32 to vector<16x1xf32>
      %25 = arith.mulf %24, %23 : vector<16x1xf32>
      %26 = arith.subf %20, %25 : vector<16x1xf32>
      %cst_15 = arith.constant 0.0322580636 : f32
      %27 = vector.broadcast %cst_15 : f32 to vector<16x1xf32>
      %28 = arith.mulf %26, %27 : vector<16x1xf32>
      %cst_16 = arith.constant 0.000000e+00 : f32
      %29 = vector.broadcast %cst_16 : f32 to vector<16x1xf32>
      %30 = arith.maximumf %28, %29 : vector<16x1xf32>
      %31 = math.sqrt %30 : vector<16x1xf32>
      %cst_17 = arith.constant 9.99999997E-7 : f32
      %32 = vector.broadcast %cst_17 : f32 to vector<16x1xf32>
      %33 = arith.addf %31, %32 : vector<16x1xf32>
      %34 = tpu.reciprocal %33 {approx = true} : vector<16x1xf32> -> vector<16x1xf32>
      %c0_18 = arith.constant 0 : index
      %c0_19 = arith.constant 0 : index
      %35 = vector.load %arg3[%c0_18, %c0_19] : memref<1x128xf32, #tpu.memory_space<vmem>>, vector<1x128xf32>
      %36 = vector.broadcast %22 : vector<16x1xf32> to vector<16x128xf32>
      %37 = arith.subf %15, %36 : vector<16x128xf32>
      %38 = vector.broadcast %34 : vector<16x1xf32> to vector<16x128xf32>
      %39 = arith.mulf %37, %38 : vector<16x128xf32>
      %40 = vector.broadcast %35 : vector<1x128xf32> to vector<16x128xf32>
      %41 = arith.mulf %40, %39 : vector<16x128xf32>
      %c0_20 = arith.constant 0 : index
      %c0_21 = arith.constant 0 : index
      %42 = vector.load %arg4[%c0_20, %c0_21] : memref<1x128xf32, #tpu.memory_space<vmem>>, vector<1x128xf32>
      %43 = vector.broadcast %42 : vector<1x128xf32> to vector<16x128xf32>
      %44 = arith.addf %41, %43 : vector<16x128xf32>
      %45 = arith.truncf %44 : vector<16x128xf32> to vector<16x128xbf16>
      %c0_22 = arith.constant 0 : index
      %c0_23 = arith.constant 0 : index
      %46 = vector.load %arg8[%c0_22, %c0_23] : memref<16x128xbf16, #tpu.memory_space<vmem>>, vector<16x128xbf16>
      tpu.vector_store %arg8[%c0_22, %c0_23], %45 {strides = array<i32>} : memref<16x128xbf16, #tpu.memory_space<vmem>>, vector<16x128xbf16>,
    } else {
    }
    %c0 = arith.constant 0 : index
    %c0_1 = arith.constant 0 : index
    %3 = vector.load %arg8[%c0, %c0_1] : memref<16x128xbf16, #tpu.memory_space<vmem>>, vector<16x128xbf16>
    %c0_2 = arith.constant 0 : index
    %c0_3 = arith.constant 0 : index
    %4 = vector.load %arg5[%c0_2, %c0_3] : memref<128x128xbf16, #tpu.memory_space<vmem>>, vector<128x128xbf16>
    %cst = arith.constant dense<0.000000e+00> : vector<16x128xf32>
    %5 = tpu.matmul %3, %4, %cst {dimension_numbers = #tpu.dot_dimension_numbers<[1], [0], [0], [1], [0, 0, 1, 1], [], []>} : vector<16x128xbf16>, vector<128x128xbf16>, vector<16x128xf32> -> vector<16x128xf32>
    %c0_4 = arith.constant 0 : index
    %c0_5 = arith.constant 0 : index
    %6 = vector.load %arg6[%c0_4, %c0_5] : memref<1x128xf32, #tpu.memory_space<vmem>>, vector<1x128xf32>
    %7 = vector.broadcast %6 : vector<1x128xf32> to vector<16x128xf32>
    %8 = arith.addf %5, %7 : vector<16x128xf32>
    %c128_i32 = arith.constant 128 : i32
    %9 = arith.muli %arg1, %c128_i32 : i32
    %10 = tpu.assume_multiple %9, 128 : i32
    %c0_6 = arith.constant 0 : index
    %11 = arith.index_cast %10 : i32 to index
    %12 = vector.load %arg2[%c0_6, %11] : memref<16x128xf32, #tpu.memory_space<vmem>>, vector<16x128xf32>
    %13 = arith.addf %12, %8 : vector<16x128xf32>
    %c0_7 = arith.constant 0 : index
    %c0_8 = arith.constant 0 : index
    %14 = vector.load %arg7[%c0_7, %c0_8] : memref<16x128xf32, #tpu.memory_space<vmem>>, vector<16x128xf32>
    tpu.vector_store %arg7[%c0_7, %c0_8], %13 {strides = array<i32>} : memref<16x128xf32, #tpu.memory_space<vmem>>, vector<16x128xf32>,
    return
  }
  func.func @transform_0(%arg0: i32, %arg1: i32) -> (i32, i32) {
    %c0_i32 = arith.constant 0 : i32
    %c0_i32_0 = arith.constant 0 : i32
    return %arg0, %c0_i32 : i32, i32
  }
  func.func @transform_1(%arg0: i32, %arg1: i32) -> (i32, i32) {
    %c0_i32 = arith.constant 0 : i32
    %c0_i32_0 = arith.constant 0 : i32
    %c0_i32_1 = arith.constant 0 : i32
    return %c0_i32, %c0_i32_0 : i32, i32
  }
  func.func @transform_2(%arg0: i32, %arg1: i32) -> (i32, i32) {
    %c0_i32 = arith.constant 0 : i32
    %c0_i32_0 = arith.constant 0 : i32
    %c0_i32_1 = arith.constant 0 : i32
    return %c0_i32, %c0_i32_0 : i32, i32
  }
  func.func @transform_3(%arg0: i32, %arg1: i32) -> (i32, i32) {
    %c0_i32 = arith.constant 0 : i32
    %c0_i32_0 = arith.constant 0 : i32
    %c0_i32_1 = arith.constant 0 : i32
    return %c0_i32, %c0_i32_0 : i32, i32
  }
  func.func @transform_4(%arg0: i32, %arg1: i32) -> (i32, i32) {
    %c0_i32 = arith.constant 0 : i32
    %c0_i32_0 = arith.constant 0 : i32
    return %c0_i32, %arg1 : i32, i32
  }
  func.func @transform_5(%arg0: i32, %arg1: i32) -> (i32, i32) {
    %c0_i32 = arith.constant 0 : i32
    return %arg0, %arg1 : i32, i32
  }
}

</mosaic_0001>

<llo_original>
// kernel: tpu_custom_call.1
$region0: #{tpu_custom_call.1}
  #allocation0 [shape = 'u32[]', space=smem, size = 0x4, offset = 0x4, fixed_abs, tag = 'smem constant byte address 0x4 - core index']
  #allocation1 [shape = 'u32[72,128]{1,0:T(1,128)}', space=vmem, size = 0x9000, scoped, tag = 'internal scratch']
  #allocation2 [shape = 'bf16[16,128]{1,0:T(8,128)(2,1)}', space=vmem, size = 0x1000, scoped, tag = 'scratch operand']
  %s0 = inlined_call_operand.hbm [shape: f32[16,128], index: 0, kind: input, shape index: {}]
  %s1 = inlined_call_operand.hbm [shape: f32[1,128], index: 1, kind: input, shape index: {}]
  %s2 = inlined_call_operand.vmem [shape: f32[1,128], index: 2, kind: input, shape index: {}]
  %s3 = inlined_call_operand.hbm [shape: bf16[128,128], index: 3, kind: input, shape index: {}]
  %s4 = inlined_call_operand.vmem [shape: f32[1,128], index: 4, kind: input, shape index: {}]
  %s5 = inlined_call_operand.hbm [shape: f32[16,128], index: 5, kind: output, shape index: {}]
  %s6 = sld [smem:[#allocation0]]
  $region46: #{tpu_custom_call.1} parent=0
    _
  %s8 = ssub.s32 1, %s6
  %s9 = scalar_select 0, %s8, %s6
  $region1: #{tpu_custom_call.1} parent=0
    #allocation3 [shape = 'u8[8192]{0}', space=vmem, size = 0x2000, scoped, tag = 'input window, operand 0, single buffered']
    #allocation4 [shape = 's32[1]{0}', space=sflag, size = 0x4, scoped, tag = 'scoped memory for tpu_custom_call.1']
    #allocation5 [shape = 's32[1]{0}', space=sflag, size = 0x4, scoped, tag = 'scoped memory for tpu_custom_call.1']
    #allocation6 [shape = 'u8[512]{0}', space=vmem, size = 0x400, scoped, tag = 'input window, operand 1, single buffered']
    #allocation7 [shape = 's32[1]{0}', space=sflag, size = 0x4, scoped, tag = 'scoped memory for tpu_custom_call.1']
    #allocation8 [shape = 'u8[32768]{0}', space=vmem, size = 0x8000, scoped, tag = 'input window, operand 3, single buffered']
    #allocation9 [shape = 'u8[8192]{0}', space=vmem, size = 0x2000, scoped, tag = 'output window, operand 0, single buffered']
    %10 = vsyncpa [#allocation4], 0
    %11 = vsyncpa [#allocation7], 0
    %12 = vsyncpa [#allocation5], 0
    // Predicated region
    $region2: #{tpu_custom_call.1} parent=1 // pred_check
      _
    $region3: #{tpu_custom_call.1} parent=1 // pred_check_branch
      %14 = sbr.rel (0) target = $region5
    $region4: #{tpu_custom_call.1} parent=1 // pred_region
      %16 = vsyncadd [#allocation4], 0
      %s17 = sshll.u32 %s0, 4
      %s18 = int_to_ptr.hbm [resolvable:$true] %s17
      %s19 = sshll.u32 [#allocation3], 4
      %s20 = int_to_ptr.vmem [resolvable:$true] %s19
      %25 = dma.hbm_to_vmem [thread:$0]  %s18, 256, %s20, [#allocation4], 128, 128, 8
    $region5: #{tpu_custom_call.1} parent=1 // pred_fallthru
      _
    // Predicated region
    $region6: #{tpu_custom_call.1} parent=1 // pred_check
      _
    $region7: #{tpu_custom_call.1} parent=1 // pred_check_branch
      %27 = sbr.rel (0) target = $region9
    $region8: #{tpu_custom_call.1} parent=1 // pred_region
      %29 = vsyncadd [#allocation7], 0
      %s31 = sshll.u32 %s1, 4
      %s32 = int_to_ptr.hbm [resolvable:$true] %s31
      %s33 = sshll.u32 [#allocation6], 4
      %s34 = int_to_ptr.vmem [resolvable:$true] %s33
      %36 = dma.hbm_to_vmem [thread:$0]  %s32, 16, %s34, [#allocation7]
    $region9: #{tpu_custom_call.1} parent=1 // pred_fallthru
      _
    // Predicated region
    $region10: #{tpu_custom_call.1} parent=1 // pred_check
      _
    $region11: #{tpu_custom_call.1} parent=1 // pred_check_branch
      %38 = sbr.rel (0) target = $region13
    $region12: #{tpu_custom_call.1} parent=1 // pred_region
      _
    $region13: #{tpu_custom_call.1} parent=1 // pred_fallthru
      _
    // Predicated region
    $region14: #{tpu_custom_call.1} parent=1 // pred_check
      _
    $region15: #{tpu_custom_call.1} parent=1 // pred_check_branch
      %40 = sbr.rel (0) target = $region17
    $region16: #{tpu_custom_call.1} parent=1 // pred_region
      %42 = vsyncadd [#allocation7], 0
      %s43 = sshll.u32 %s3, 4
      %s44 = int_to_ptr.hbm [resolvable:$true] %s43
      %s45 = sshll.u32 [#allocation8], 4
      %s46 = int_to_ptr.vmem [resolvable:$true] %s45
      %51 = dma.hbm_to_vmem [thread:$0]  %s44, 1024, %s46, [#allocation7], 64, 64, 4
    $region17: #{tpu_custom_call.1} parent=1 // pred_fallthru
      _
    // Predicated region
    $region18: #{tpu_custom_call.1} parent=1 // pred_check
      _
    $region19: #{tpu_custom_call.1} parent=1 // pred_check_branch
      %53 = sbr.rel (0) target = $region21
    $region20: #{tpu_custom_call.1} parent=1 // pred_region
      _
    $region21: #{tpu_custom_call.1} parent=1 // pred_fallthru
      _
    // Predicated region
    $region22: #{tpu_custom_call.1} parent=1 // pred_check
      _
    $region23: #{tpu_custom_call.1} parent=1 // pred_check_branch
      %55 = sbr.rel (0) target = $region25
    $region24: #{tpu_custom_call.1} parent=1 // pred_region
      %57 = dma.done [#allocation4], 256
    $region25: #{tpu_custom_call.1} parent=1 // pred_fallthru
      _
    // Predicated region
    $region26: #{tpu_custom_call.1} parent=1 // pred_check
      _
    $region27: #{tpu_custom_call.1} parent=1 // pred_check_branch
      %59 = sbr.rel (0) target = $region29
    $region28: #{tpu_custom_call.1} parent=1 // pred_region
      %61 = dma.done [#allocation7], 16
    $region29: #{tpu_custom_call.1} parent=1 // pred_fallthru
      _
    // Predicated region
    $region30: #{tpu_custom_call.1} parent=1 // pred_check
      _
    $region31: #{tpu_custom_call.1} parent=1 // pred_check_branch
      %63 = sbr.rel (0) target = $region33
    $region32: #{tpu_custom_call.1} parent=1 // pred_region
      %65 = dma.done [#allocation7], 1024
    $region33: #{tpu_custom_call.1} parent=1 // pred_fallthru
      _
    %p66 = scmp.eq.s32.totalorder 0, 0
    // Predicated region
    $region34: #{tpu_custom_call.1} parent=1 // pred_check
      %p67 = pneg %p66
    $region35: #{tpu_custom_call.1} parent=1 // pred_check_branch
      %69 = sbr.rel (%p67) target = $region37
    $region36: #{tpu_custom_call.1} parent=1 // pred_region
      %v70 = vld [vmem:[#allocation3] sm:$0xff]
      %v71 = vld [vmem:[#allocation3 + $0x8] sm:$0xff]
      %72 = vadd.xlane.f32.xlu0 %v70
      %v73 = vpop.xlane.xlu0 %72
      %74 = vadd.xlane.f32.xlu0 %v71
      %v75 = vpop.xlane.xlu0 %74
      %v76 = vmul.f32 %v70, %v70
      %v77 = vmul.f32 %v71, %v71
      %78 = vadd.xlane.f32.xlu0 %v76
      %v79 = vpop.xlane.xlu0 %78
      %80 = vadd.xlane.f32.xlu0 %v77
      %v81 = vpop.xlane.xlu0 %80
      %v82 = vmul.f32 %v73, 0.03125
      %v83 = vmul.f32 %v75, 0.03125
      %v84 = vmul.f32 %v82, %v82
      %v85 = vmul.f32 %v83, %v83
      %v86 = vmul.f32 %v84, 32.0
      %v87 = vmul.f32 %v85, 32.0
      %v88 = vsub.f32 %v79, %v86
      %v89 = vsub.f32 %v81, %v87
      %v90 = vmul.f32 %v88, 0.032258064
      %v91 = vmul.f32 %v89, 0.032258064
      %v92 = vmax.f32 %v90, 0.0
      %v93 = vmax.f32 %v91, 0.0
      %v94 = vrsqrt.pop %v92
      %v95 = vmul.f32 %v94, %v92
      %v96 = vmul.f32 %v95, %v94
      %v97 = vmul.f32 0.5, %v96
      %v98 = vsub.f32 1.5, %v97
      %v99 = vmul.f32 %v94, %v98
      %v100 = vmul.f32 %v92, %v99
      %vm101 = vcmp.eq.f32.partialorder %v92, inf
      %v102 = vsel %vm101, %v92, %v100
      %vm103 = vcmp.eq.f32.partialorder %v92, 0.0
      %v104 = vand.u32 %v92, 2147483648
      %v105 = vsel %vm103, %v104, %v102
      %v106 = vrsqrt.pop %v93
      %v107 = vmul.f32 %v106, %v93
      %v108 = vmul.f32 %v107, %v106
      %v109 = vmul.f32 0.5, %v108
      %v110 = vsub.f32 1.5, %v109
      %v111 = vmul.f32 %v106, %v110
      %v112 = vmul.f32 %v93, %v111
      %vm113 = vcmp.eq.f32.partialorder %v93, inf
      %v114 = vsel %vm113, %v93, %v112
      %vm115 = vcmp.eq.f32.partialorder %v93, 0.0
      %v116 = vand.u32 %v93, 2147483648
      %v117 = vsel %vm115, %v116, %v114
      %v118 = vadd.f32 %v105, 1e-06
      %v119 = vadd.f32 %v117, 1e-06
      %v120 = vrcp.pop %v118
      %v121 = vrcp.pop %v119
      %v122 = vld [vmem:[#allocation6] sm:$0x1]
      %v123 = vsub.f32 %v70, %v82
      %v124 = vsub.f32 %v71, %v83
      %v125 = vmul.f32 %v123, %v120
      %v126 = vmul.f32 %v124, %v121
      %v128 = vperm.slane %v122, 0
      %v130 = vmul.f32 %v128, %v125
      %v131 = vmul.f32 %v128, %v126
      %v132 = vld [vmem:[%s2] sm:$0x1]
      %v134 = vperm.slane %v132, 0
      %v136 = vadd.f32 %v130, %v134
      %v137 = vadd.f32 %v131, %v134
      %v138 = vpack.c.bf16 %v136, %v136
      %v139 = vpack.c.bf16 %v137, %v137
      %140 = vst [vmem:[#allocation2] sm:$0xf] %v138
      %141 = vst [vmem:[#allocation2 + $0x4] sm:$0xf] %v139
    $region37: #{tpu_custom_call.1} parent=1 // pred_fallthru
      _
    %v142 = vld [vmem:[#allocation2] sm:$0xf]
    %v143 = vld [vmem:[#allocation2 + $0x4] sm:$0xf]
    %v144 = vld [vmem:[#allocation8] sm:$0xf]
    %v145 = vld [vmem:[#allocation8 + $0x4] sm:$0xf]
    %v146 = vld [vmem:[#allocation8 + $0x8] sm:$0xf]
    %v147 = vld [vmem:[#allocation8 + $0xc] sm:$0xf]
    %v148 = vld [vmem:[#allocation8 + $0x10] sm:$0xf]
    %v149 = vld [vmem:[#allocation8 + $0x14] sm:$0xf]
    %v150 = vld [vmem:[#allocation8 + $0x18] sm:$0xf]
    %v151 = vld [vmem:[#allocation8 + $0x1c] sm:$0xf]
    %v152 = vld [vmem:[#allocation8 + $0x20] sm:$0xf]
    %v153 = vld [vmem:[#allocation8 + $0x24] sm:$0xf]
    %v154 = vld [vmem:[#allocation8 + $0x28] sm:$0xf]
    %v155 = vld [vmem:[#allocation8 + $0x2c] sm:$0xf]
    %v156 = vld [vmem:[#allocation8 + $0x30] sm:$0xf]
    %v157 = vld [vmem:[#allocation8 + $0x34] sm:$0xf]
    %v158 = vld [vmem:[#allocation8 + $0x38] sm:$0xf]
    %v159 = vld [vmem:[#allocation8 + $0x3c] sm:$0xf]
    %v160 = vld [vmem:[%s4] sm:$0x1]
    %v162 = vperm.slane %v160, 0
    %v166 = vunpack.c.l.b16 %v142
    %v167 = vunpack.c.l.b16 %v143
    %v168 = vpack.c.b16 %v167, %v166
    %v186 = vunpack.c.l.b16 %v144
    %v187 = vunpack.c.l.b16 %v145
    %v188 = vunpack.c.l.b16 %v146
    %v189 = vunpack.c.l.b16 %v147
    %v190 = vunpack.c.l.b16 %v148
    %v191 = vunpack.c.l.b16 %v149
    %v192 = vunpack.c.l.b16 %v150
    %v193 = vunpack.c.l.b16 %v151
    %v194 = vunpack.c.l.b16 %v152
    %v195 = vunpack.c.l.b16 %v153
    %v196 = vunpack.c.l.b16 %v154
    %v197 = vunpack.c.l.b16 %v155
    %v198 = vunpack.c.l.b16 %v156
    %v199 = vunpack.c.l.b16 %v157
    %v200 = vunpack.c.l.b16 %v158
    %v201 = vunpack.c.l.b16 %v159
    %v202 = vpack.c.b16 %v187, %v186
    %v203 = vpack.c.b16 %v189, %v188
    %v204 = vpack.c.b16 %v191, %v190
    %v205 = vpack.c.b16 %v193, %v192
    %v206 = vpack.c.b16 %v195, %v194
    %v207 = vpack.c.b16 %v197, %v196
    %v208 = vpack.c.b16 %v199, %v198
    %v209 = vpack.c.b16 %v201, %v200
    %218 = vmatpush.bf16.msra.mxu0 %v209
    %219 = vmatpush.bf16.msra.mxu0 %v208
    %220 = vmatpush.bf16.msra.mxu0 %v207
    %221 = vmatpush.bf16.msra.mxu0 %v206
    %222 = vmatpush.bf16.msra.mxu0 %v205
    %223 = vmatpush.bf16.msra.mxu0 %v204
    %224 = vmatpush.bf16.msra.mxu0 %v203
    %225 = vmatpush.bf16.msra.mxu0 %v202
    %226 = vmatmul.bf16.gmra.mxu0 %v168
    %v227 = vpop.f32.mrf.mxu0
    %v228 = vadd.f32 %v162, %v227
    %v229 = vpop.f32.mrf.mxu0
    %v230 = vadd.f32 %v162, %v229
    %231 = vdwg.mxu0
    %s232 = smul.u32 0, 128
    %s233 = sshra.s32 %s232, 7
    %s234 = sand.u32 %s232, 127
    %s235 = scalar_lea.vmem [#allocation3], %s233
    %v236 = vld [vmem:[%s235] sm:$0xff]
    %v237 = vld [vmem:[%s235 + $0x8] sm:$0xff]
    %v238 = vadd.f32 %v236, %v228
    %v239 = vadd.f32 %v237, %v230
    %240 = vst [vmem:[#allocation9] sm:$0xff] %v238
    %241 = vst [vmem:[#allocation9 + $0x8] sm:$0xff] %v239
    // Predicated region
    $region38: #{tpu_custom_call.1} parent=1 // pred_check
      _
    $region39: #{tpu_custom_call.1} parent=1 // pred_check_branch
      %243 = sbr.rel (0) target = $region41
    $region40: #{tpu_custom_call.1} parent=1 // pred_region
      %245 = vsyncadd [#allocation5], 0
      %s246 = sshll.u32 [#allocation9], 4
      %s247 = int_to_ptr.vmem [resolvable:$true] %s246
      %s248 = sshll.u32 %s5, 4
      %s249 = int_to_ptr.hbm [resolvable:$true] %s248
      %254 = dma.vmem_to_hbm [thread:$0]  %s247, 256, %s249, [#allocation5], 128, 128, 8
    $region41: #{tpu_custom_call.1} parent=1 // pred_fallthru
      _
    // Predicated region
    $region42: #{tpu_custom_call.1} parent=1 // pred_check
      _
    $region43: #{tpu_custom_call.1} parent=1 // pred_check_branch
      %256 = sbr.rel (0) target = $region45
    $region44: #{tpu_custom_call.1} parent=1 // pred_region
      %258 = dma.done [#allocation5], 256
    $region45: #{tpu_custom_call.1} parent=1 // pred_fallthru
      _
    %259 = vsyncpa [#allocation4], 1
    %260 = vsyncpa [#allocation7], 1
    %261 = vsyncpa [#allocation5], 1

</llo_original>
